<compile_context>
chip_gen: v7x
topology: tpu7x:2x2x1
jax: 0.10.0
libtpu: 0.0.40
codegen_flags: <defaults>
</compile_context>

<pallas_src>
import functools

import jax
import jax.numpy as jnp
from jax import lax
from jax.experimental import pallas as pl
from jax.experimental.pallas import tpu as pltpu


def _round_up(x, m):
    return ((x + m - 1) // m) * m


def _attention_pooling_kernel(feat_ref, a_ref, batch_ref, out_ref,
                              m_sc, l_sc, acc_sc):
    # feat_ref  : (tile_n, Hp)  compute_dtype   node-feature tile
    # a_ref     : (1, Hp)       compute_dtype   attention vector (a.T), H-padded
    # batch_ref : (1, tile_n)   int32           graph id per node (padding = Bp)
    # out_ref   : (tile_b, Hp)  float32         pooled per-graph output block
    # m_sc/l_sc : (tile_b, 1)   float32         running max / running denom
    # acc_sc    : (tile_b, Hp)  float32         running weighted-sum accumulator
    n = pl.program_id(1)
    n_last = pl.num_programs(1) - 1

    @pl.when(n == 0)
    def _init():
        m_sc[...] = jnp.full_like(m_sc, -1e30)
        l_sc[...] = jnp.zeros_like(l_sc)
        acc_sc[...] = jnp.zeros_like(acc_sc)

    feat = feat_ref[...]                         # (tile_n, Hp)
    a_row = a_ref[...]                           # (1, Hp)
    batch = batch_ref[...]                       # (1, tile_n)

    tile_n = feat.shape[0]
    tile_b = out_ref.shape[0]

    # att_logits = leaky_relu(feature @ a, 0.2), computed as a @ feature^T -> (1, tile_n)
    logits = lax.dot_general(
        a_row, feat, (((1,), (1,)), ((), ())),
        preferred_element_type=jnp.float32)      # (1, tile_n) f32
    logits = jnp.where(logits >= 0, logits, 0.2 * logits)

    # Membership mask of this graph block vs this node tile.
    b0 = pl.program_id(0) * tile_b
    row_ids = b0 + lax.broadcasted_iota(jnp.int32, (tile_b, tile_n), 0)
    mask = (batch == row_ids)                    # (tile_b, tile_n) bool
    logits_b = jnp.broadcast_to(logits, (tile_b, tile_n))

    # Online (flash-style) softmax update.
    blk_max = jnp.max(jnp.where(mask, logits_b, jnp.float32(-1e30)),
                      axis=1, keepdims=True)     # (tile_b, 1)
    m_new = jnp.maximum(m_sc[...], blk_max)
    corr = jnp.exp(m_sc[...] - m_new)            # (tile_b, 1); exp(0)=1 when both -1e30
    e = jnp.where(mask, jnp.exp(logits_b - m_new), 0.0)      # (tile_b, tile_n) f32

    l_sc[...] = corr * l_sc[...] + jnp.sum(e, axis=1, keepdims=True)
    acc_sc[...] = corr * acc_sc[...] + jnp.dot(
        e.astype(feat.dtype), feat, preferred_element_type=jnp.float32)
    m_sc[...] = m_new

    @pl.when(n == n_last)
    def _finalize():
        l = l_sc[...]
        inv = jnp.where(l > 0,
                        pl.reciprocal(jnp.maximum(l, 1e-30), approx=True),
                        0.0)                     # empty-graph guard -> 0, not NaN
        out_ref[...] = (acc_sc[...] * inv).astype(out_ref.dtype)


@functools.partial(jax.jit,
                   static_argnames=("num_graphs", "tile_n", "tile_b",
                                    "compute_dtype"))
def attention_pooling(feature, a, batch, num_graphs, *,
                      tile_n=512, tile_b=None,
                      compute_dtype=jnp.bfloat16):
    """feature: (N, H) f32, a: (H, 1) f32, batch: (N,) int, -> (num_graphs, H) f32."""
    feature = jnp.asarray(feature)
    a = jnp.asarray(a)
    batch = jnp.asarray(batch)
    N, H = feature.shape

    # Lane-dense H padding and 128-multiple node tiles (batch block is (1, tile_n)).
    Hp = _round_up(max(H, 1), 128)
    tn = _round_up(min(tile_n, _round_up(N, 128)), 128)
    Np = _round_up(N, tn)

    # Graph-block axis: a single block by default; if split, use 8-row blocks.
    tb = num_graphs if tile_b is None else max(1, min(int(tile_b), num_graphs))
    if tb < num_graphs:
        tb = _round_up(tb, 8)
        if tb >= num_graphs:
            tb = num_graphs
    Bp = _round_up(num_graphs, tb)

    # Padded / dtype-cast inputs (padded nodes get graph id Bp -> never match).
    feat_p = jnp.zeros((Np, Hp), compute_dtype).at[:N, :H].set(
        feature.astype(compute_dtype))
    a_p = jnp.zeros((1, Hp), compute_dtype).at[0, :H].set(
        a.reshape(-1).astype(compute_dtype))
    batch_p = jnp.full((1, Np), Bp, jnp.int32).at[0, :N].set(
        batch.astype(jnp.int32))

    grid = (Bp // tb, Np // tn)

    # Generous VMEM budget: double-buffered streams + scratch + (tb, tn) temps.
    itemsize = jnp.dtype(compute_dtype).itemsize
    est = (2 * tn * Hp * itemsize          # feature double-buffer
           + 2 * Hp * itemsize             # a
           + 2 * tn * 4                    # batch ids
           + 2 * tb * Hp * 4               # output block
           + tb * (Hp + 2) * 4             # scratch acc/m/l
           + 8 * tb * tn * 4)              # (tb, tn) vector temporaries headroom
    vmem_limit = min(max(2 * est + 8 * 2**20, 16 * 2**20), 128 * 2**20)

    out_p = pl.pallas_call(
        _attention_pooling_kernel,
        out_shape=jax.ShapeDtypeStruct((Bp, Hp), jnp.float32),
        grid_spec=pltpu.PrefetchScalarGridSpec(
            num_scalar_prefetch=0,
            grid=grid,
            in_specs=[
                pl.BlockSpec((tn, Hp), lambda b, n: (n, 0)),   # feature tile
                pl.BlockSpec((1, Hp), lambda b, n: (0, 0)),    # a (resident)
                pl.BlockSpec((1, tn), lambda b, n: (0, n)),    # batch ids tile
            ],
            out_specs=pl.BlockSpec((tb, Hp), lambda b, n: (b, 0)),
            scratch_shapes=[
                pltpu.VMEM((tb, 1), jnp.float32),    # running max m
                pltpu.VMEM((tb, 1), jnp.float32),    # running denom l
                pltpu.VMEM((tb, Hp), jnp.float32),   # accumulator
            ],
        ),
        compiler_params=pltpu.CompilerParams(
            dimension_semantics=("parallel", "arbitrary"),
            vmem_limit_bytes=int(vmem_limit)),
    )(feat_p, a_p, batch_p)

    return out_p[:num_graphs, :H]


def _reference(feature, a, batch, num_graphs):
    logits = (feature @ a)[:, 0]
    logits = jnp.where(logits >= 0, logits, 0.2 * logits)
    gmax = jax.ops.segment_max(logits, batch, num_segments=num_graphs)
    e = jnp.exp(logits - gmax[batch])
    denom = jax.ops.segment_sum(e, batch, num_segments=num_graphs)
    w = e / denom[batch]
    return jax.ops.segment_sum(w[:, None] * feature, batch, num_segments=num_graphs)


if __name__ == "__main__":
    key = jax.random.PRNGKey(0)
    k_feat, k_a = jax.random.split(key)

    N, H, B = 8, 32, 3  # 8 nodes, hidden_dim=32, 3 graphs (graph 2 is empty)

    feature = jax.random.normal(k_feat, (N, H), dtype=jnp.float32)
    # xavier_uniform_(a, gain=1.414) on shape (H, 1): bound = gain * sqrt(6 / (H + 1))
    bound = 1.414 * (6.0 / (H + 1)) ** 0.5
    a = jax.random.uniform(k_a, (H, 1), minval=-bound, maxval=bound, dtype=jnp.float32)
    batch = jnp.array([0, 0, 0, 1, 1, 1, 1, 0], dtype=jnp.int32)

    ref = _reference(feature, a, batch, B)

    # bf16-streamed path (default).
    out_bf16 = jax.block_until_ready(attention_pooling(feature, a, batch, B))
    assert out_bf16.shape == (B, H)
    assert jnp.allclose(out_bf16, ref, atol=5e-2, rtol=5e-2), "bf16 path mismatch"

    # f32 path (tighter check of the online-softmax accumulation).
    out_f32 = jax.block_until_ready(
        attention_pooling(feature, a, batch, B, compute_dtype=jnp.float32))
    assert jnp.allclose(out_f32, ref, atol=1e-2, rtol=1e-2), "f32 path mismatch"

    print("KERNEL_OK")
</pallas_src>

<mosaic_0001>
module attributes {stable_mosaic.version = 11 : i64} {
  func.func @_attention_pooling_kernel(%arg0: i32, %arg1: i32, %arg2: memref<128x128xbf16, #tpu.memory_space<vmem>>, %arg3: memref<1x128xbf16, #tpu.memory_space<vmem>>, %arg4: memref<1x128xi32, #tpu.memory_space<vmem>>, %arg5: memref<3x128xf32, #tpu.memory_space<vmem>>, %arg6: memref<3x1xf32, #tpu.memory_space<vmem>>, %arg7: memref<3x1xf32, #tpu.memory_space<vmem>>, %arg8: memref<3x128xf32, #tpu.memory_space<vmem>>) attributes {dimension_semantics = [#tpu.dimension_semantics<parallel>, #tpu.dimension_semantics<arbitrary>], iteration_bounds = array<i64: 1, 1>, scalar_prefetch = 0 : i64, scratch_operands = 3 : i64, tpu.core_type = #tpu.core_type<tc>, window_params = [{transform_indices = @transform_0, window_bounds = array<i64: 128, 128>}, {pipeline_mode = #tpu.pipeline_mode<synchronous>, transform_indices = @transform_1, window_bounds = array<i64: 1, 128>}, {transform_indices = @transform_2, window_bounds = array<i64: 1, 128>}, {transform_indices = @transform_3, window_bounds = array<i64: 3, 128>}]} {
    %c0_i32 = arith.constant 0 : i32
    %0 = arith.cmpi eq, %arg1, %c0_i32 : i32
    %1 = arith.extui %0 : i1 to i32
    %c0_i32_0 = arith.constant 0 : i32
    %2 = arith.cmpi ne, %1, %c0_i32_0 : i32
    scf.if %2 {
      %cst_29 = arith.constant -1.000000e+30 : f32
      %51 = vector.broadcast %cst_29 : f32 to vector<3x1xf32>
      %c0_30 = arith.constant 0 : index
      %c0_31 = arith.constant 0 : index
      %52 = vector.load %arg6[%c0_30, %c0_31] : memref<3x1xf32, #tpu.memory_space<vmem>>, vector<3x1xf32>
      tpu.vector_store %arg6[%c0_30, %c0_31], %51 {strides = array<i32>} : memref<3x1xf32, #tpu.memory_space<vmem>>, vector<3x1xf32>,
      %cst_32 = arith.constant 0.000000e+00 : f32
      %53 = vector.broadcast %cst_32 : f32 to vector<3x1xf32>
      %c0_33 = arith.constant 0 : index
      %c0_34 = arith.constant 0 : index
      %54 = vector.load %arg7[%c0_33, %c0_34] : memref<3x1xf32, #tpu.memory_space<vmem>>, vector<3x1xf32>
      tpu.vector_store %arg7[%c0_33, %c0_34], %53 {strides = array<i32>} : memref<3x1xf32, #tpu.memory_space<vmem>>, vector<3x1xf32>,
      %cst_35 = arith.constant 0.000000e+00 : f32
      %55 = vector.broadcast %cst_35 : f32 to vector<3x128xf32>
      %c0_36 = arith.constant 0 : index
      %c0_37 = arith.constant 0 : index
      %56 = vector.load %arg8[%c0_36, %c0_37] : memref<3x128xf32, #tpu.memory_space<vmem>>, vector<3x128xf32>
      tpu.vector_store %arg8[%c0_36, %c0_37], %55 {strides = array<i32>} : memref<3x128xf32, #tpu.memory_space<vmem>>, vector<3x128xf32>,
    } else {
    }
    %c0 = arith.constant 0 : index
    %c0_1 = arith.constant 0 : index
    %3 = vector.load %arg2[%c0, %c0_1] : memref<128x128xbf16, #tpu.memory_space<vmem>>, vector<128x128xbf16>
    %c0_2 = arith.constant 0 : index
    %c0_3 = arith.constant 0 : index
    %4 = vector.load %arg3[%c0_2, %c0_3] : memref<1x128xbf16, #tpu.memory_space<vmem>>, vector<1x128xbf16>
    %c0_4 = arith.constant 0 : index
    %c0_5 = arith.constant 0 : index
    %5 = vector.load %arg4[%c0_4, %c0_5] : memref<1x128xi32, #tpu.memory_space<vmem>>, vector<1x128xi32>
    %cst = arith.constant dense<0.000000e+00> : vector<1x128xf32>
    %6 = tpu.matmul %4, %3, %cst {dimension_numbers = #tpu.dot_dimension_numbers<[1], [1], [0], [0], [0, 0, 1, 0], [], []>} : vector<1x128xbf16>, vector<128x128xbf16>, vector<1x128xf32> -> vector<1x128xf32>
    %cst_6 = arith.constant 0.000000e+00 : f32
    %7 = vector.broadcast %cst_6 : f32 to vector<1x128xf32>
    %8 = arith.cmpf oge, %6, %7 : vector<1x128xf32>
    %cst_7 = arith.constant 2.000000e-01 : f32
    %9 = vector.broadcast %cst_7 : f32 to vector<1x128xf32>
    %10 = arith.mulf %9, %6 : vector<1x128xf32>
    %11 = arith.select %8, %6, %10 : vector<1x128xi1>, vector<1x128xf32>
    %c3_i32 = arith.constant 3 : i32
    %12 = arith.muli %arg0, %c3_i32 : i32
    %13 = tpu.iota {dimensions = array<i32: 0>} : vector<3x128xi32>
    %14 = vector.broadcast %12 : i32 to vector<3x128xi32>
    %15 = arith.addi %14, %13 : vector<3x128xi32>
    %16 = vector.broadcast %5 : vector<1x128xi32> to vector<3x128xi32>
    %17 = arith.cmpi eq, %16, %15 : vector<3x128xi32>
    %18 = vector.shape_cast %11 : vector<1x128xf32> to vector<1x128xf32>
    %19 = vector.broadcast %18 : vector<1x128xf32> to vector<3x128xf32>
    %cst_8 = arith.constant -1.000000e+30 : f32
    %20 = vector.broadcast %cst_8 : f32 to vector<3x128xf32>
    %21 = arith.select %17, %19, %20 : vector<3x128xi1>, vector<3x128xf32>
    %cst_9 = arith.constant dense<0xFF800000> : vector<3xf32>
    %22 = vector.multi_reduction <maximumf>, %21, %cst_9 [1] : vector<3x128xf32> to vector<3xf32>
    %23 = vector.shape_cast %22 : vector<3xf32> to vector<3x1xf32>
    %c0_10 = arith.constant 0 : index
    %c0_11 = arith.constant 0 : index
    %24 = vector.load %arg6[%c0_10, %c0_11] : memref<3x1xf32, #tpu.memory_space<vmem>>, vector<3x1xf32>
    %25 = arith.maximumf %24, %23 : vector<3x1xf32>
    %c0_12 = arith.constant 0 : index
    %c0_13 = arith.constant 0 : index
    %26 = vector.load %arg6[%c0_12, %c0_13] : memref<3x1xf32, #tpu.memory_space<vmem>>, vector<3x1xf32>
    %27 = arith.subf %26, %25 : vector<3x1xf32>
    %28 = math.exp %27 : vector<3x1xf32>
    %29 = vector.broadcast %25 : vector<3x1xf32> to vector<3x128xf32>
    %30 = arith.subf %19, %29 : vector<3x128xf32>
    %31 = math.exp %30 : vector<3x128xf32>
    %cst_14 = arith.constant 0.000000e+00 : f32
    %32 = vector.broadcast %cst_14 : f32 to vector<3x128xf32>
    %33 = arith.select %17, %31, %32 : vector<3x128xi1>, vector<3x128xf32>
    %c0_15 = arith.constant 0 : index
    %c0_16 = arith.constant 0 : index
    %34 = vector.load %arg7[%c0_15, %c0_16] : memref<3x1xf32, #tpu.memory_space<vmem>>, vector<3x1xf32>
    %35 = arith.mulf %28, %34 : vector<3x1xf32>
    %cst_17 = arith.constant dense<0.000000e+00> : vector<3xf32>
    %36 = vector.multi_reduction <add>, %33, %cst_17 [1] : vector<3x128xf32> to vector<3xf32>
    %37 = vector.shape_cast %36 : vector<3xf32> to vector<3x1xf32>
    %38 = arith.addf %35, %37 : vector<3x1xf32>
    %c0_18 = arith.constant 0 : index
    %c0_19 = arith.constant 0 : index
    %39 = vector.load %arg7[%c0_18, %c0_19] : memref<3x1xf32, #tpu.memory_space<vmem>>, vector<3x1xf32>
    tpu.vector_store %arg7[%c0_18, %c0_19], %38 {strides = array<i32>} : memref<3x1xf32, #tpu.memory_space<vmem>>, vector<3x1xf32>,
    %c0_20 = arith.constant 0 : index
    %c0_21 = arith.constant 0 : index
    %40 = vector.load %arg8[%c0_20, %c0_21] : memref<3x128xf32, #tpu.memory_space<vmem>>, vector<3x128xf32>
    %41 = vector.broadcast %28 : vector<3x1xf32> to vector<3x128xf32>
    %42 = arith.mulf %41, %40 : vector<3x128xf32>
    %43 = arith.truncf %33 : vector<3x128xf32> to vector<3x128xbf16>
    %cst_22 = arith.constant dense<0.000000e+00> : vector<3x128xf32>
    %44 = tpu.matmul %43, %3, %cst_22 {dimension_numbers = #tpu.dot_dimension_numbers<[1], [0], [0], [1], [0, 0, 1, 1], [], []>} : vector<3x128xbf16>, vector<128x128xbf16>, vector<3x128xf32> -> vector<3x128xf32>
    %45 = arith.addf %42, %44 : vector<3x128xf32>
    %c0_23 = arith.constant 0 : index
    %c0_24 = arith.constant 0 : index
    %46 = vector.load %arg8[%c0_23, %c0_24] : memref<3x128xf32, #tpu.memory_space<vmem>>, vector<3x128xf32>
    tpu.vector_store %arg8[%c0_23, %c0_24], %45 {strides = array<i32>} : memref<3x128xf32, #tpu.memory_space<vmem>>, vector<3x128xf32>,
    %c0_25 = arith.constant 0 : index
    %c0_26 = arith.constant 0 : index
    %47 = vector.load %arg6[%c0_25, %c0_26] : memref<3x1xf32, #tpu.memory_space<vmem>>, vector<3x1xf32>
    tpu.vector_store %arg6[%c0_25, %c0_26], %25 {strides = array<i32>} : memref<3x1xf32, #tpu.memory_space<vmem>>, vector<3x1xf32>,
    %c0_i32_27 = arith.constant 0 : i32
    %48 = arith.cmpi eq, %arg1, %c0_i32_27 : i32
    %49 = arith.extui %48 : i1 to i32
    %c0_i32_28 = arith.constant 0 : i32
    %50 = arith.cmpi ne, %49, %c0_i32_28 : i32
    scf.if %50 {
      %c0_29 = arith.constant 0 : index
      %c0_30 = arith.constant 0 : index
      %51 = vector.load %arg7[%c0_29, %c0_30] : memref<3x1xf32, #tpu.memory_space<vmem>>, vector<3x1xf32>
      %cst_31 = arith.constant 0.000000e+00 : f32
      %52 = vector.broadcast %cst_31 : f32 to vector<3x1xf32>
      %53 = arith.cmpf ogt, %51, %52 : vector<3x1xf32>
      %cst_32 = arith.constant 1.000000e-30 : f32
      %54 = vector.broadcast %cst_32 : f32 to vector<3x1xf32>
      %55 = arith.maximumf %51, %54 : vector<3x1xf32>
      %56 = tpu.reciprocal %55 {approx = true} : vector<3x1xf32> -> vector<3x1xf32>
      %cst_33 = arith.constant 0.000000e+00 : f32
      %57 = vector.broadcast %cst_33 : f32 to vector<3x1xf32>
      %58 = arith.select %53, %56, %57 : vector<3x1xi1>, vector<3x1xf32>
      %c0_34 = arith.constant 0 : index
      %c0_35 = arith.constant 0 : index
      %59 = vector.load %arg8[%c0_34, %c0_35] : memref<3x128xf32, #tpu.memory_space<vmem>>, vector<3x128xf32>
      %60 = vector.broadcast %58 : vector<3x1xf32> to vector<3x128xf32>
      %61 = arith.mulf %59, %60 : vector<3x128xf32>
      %c0_36 = arith.constant 0 : index
      %c0_37 = arith.constant 0 : index
      %62 = vector.load %arg5[%c0_36, %c0_37] : memref<3x128xf32, #tpu.memory_space<vmem>>, vector<3x128xf32>
      tpu.vector_store %arg5[%c0_36, %c0_37], %61 {strides = array<i32>} : memref<3x128xf32, #tpu.memory_space<vmem>>, vector<3x128xf32>,
    } else {
    }
    return
  }
  func.func @transform_0(%arg0: i32, %arg1: i32) -> (i32, i32) {
    %c0_i32 = arith.constant 0 : i32
    %c0_i32_0 = arith.constant 0 : i32
    return %arg1, %c0_i32 : i32, i32
  }
  func.func @transform_1(%arg0: i32, %arg1: i32) -> (i32, i32) {
    %c0_i32 = arith.constant 0 : i32
    %c0_i32_0 = arith.constant 0 : i32
    %c0_i32_1 = arith.constant 0 : i32
    return %c0_i32, %c0_i32_0 : i32, i32
  }
  func.func @transform_2(%arg0: i32, %arg1: i32) -> (i32, i32) {
    %c0_i32 = arith.constant 0 : i32
    %c0_i32_0 = arith.constant 0 : i32
    return %c0_i32, %arg1 : i32, i32
  }
  func.func @transform_3(%arg0: i32, %arg1: i32) -> (i32, i32) {
    %c0_i32 = arith.constant 0 : i32
    %c0_i32_0 = arith.constant 0 : i32
    return %arg0, %c0_i32 : i32, i32
  }
}

</mosaic_0001>

<llo_original>
// kernel: attention_pooling.1
$region0: #{attention_pooling.1}
  #allocation0 [shape = 'u32[]', space=smem, size = 0x4, offset = 0x4, fixed_abs, tag = 'smem constant byte address 0x4 - core index']
  #allocation1 [shape = 'u32[144,128]{1,0:T(1,128)}', space=vmem, size = 0x12000, scoped, tag = 'internal scratch']
  #allocation2 [shape = 'f32[3,1]{1,0:T(4,128)}', space=vmem, size = 0x800, scoped, tag = 'scratch operand']
  #allocation3 [shape = 'f32[3,1]{1,0:T(4,128)}', space=vmem, size = 0x800, scoped, tag = 'scratch operand']
  #allocation4 [shape = 'f32[3,128]{1,0:T(4,128)}', space=vmem, size = 0x800, scoped, tag = 'scratch operand']
  %s0 = inlined_call_operand.vmem [shape: bf16[128,128], index: 0, kind: input, shape index: {}]
  %s1 = inlined_call_operand.vmem [shape: bf16[1,128], index: 1, kind: input, shape index: {}]
  %s2 = inlined_call_operand.vmem [shape: s32[1,128], index: 2, kind: input, shape index: {}]
  %s3 = inlined_call_operand.hbm [shape: f32[3,128], index: 3, kind: output, shape index: {}]
  %s4 = sld [smem:[#allocation0]]
  $region30: #{attention_pooling.1} parent=0
    _
  %s6 = ssub.s32 1, %s4
  %s7 = scalar_select 0, %s6, %s4
  $region1: #{attention_pooling.1} parent=0
    #allocation5 [shape = 'u8[2048]{0}', space=vmem, size = 0x800, scoped, tag = 'output window, operand 0, single buffered']
    #allocation6 [shape = 's32[1]{0}', space=sflag, size = 0x4, scoped, tag = 'scoped memory for attention_pooling.1']
    %8 = vsyncpa [#allocation6], 0
    // Predicated region
    $region2: #{attention_pooling.1} parent=1 // pred_check
      _
    $region3: #{attention_pooling.1} parent=1 // pred_check_branch
      %10 = sbr.rel (0) target = $region5
    $region4: #{attention_pooling.1} parent=1 // pred_region
      _
    $region5: #{attention_pooling.1} parent=1 // pred_fallthru
      _
    // Predicated region
    $region6: #{attention_pooling.1} parent=1 // pred_check
      _
    $region7: #{attention_pooling.1} parent=1 // pred_check_branch
      %12 = sbr.rel (0) target = $region9
    $region8: #{attention_pooling.1} parent=1 // pred_region
      _
    $region9: #{attention_pooling.1} parent=1 // pred_fallthru
      _
    // Predicated region
    $region10: #{attention_pooling.1} parent=1 // pred_check
      _
    $region11: #{attention_pooling.1} parent=1 // pred_check_branch
      %14 = sbr.rel (0) target = $region13
    $region12: #{attention_pooling.1} parent=1 // pred_region
      _
    $region13: #{attention_pooling.1} parent=1 // pred_fallthru
      _
    %p16 = scmp.eq.s32.totalorder 0, 0
    // Predicated region
    $region14: #{attention_pooling.1} parent=1 // pred_check
      %p17 = pneg %p16
    $region15: #{attention_pooling.1} parent=1 // pred_check_branch
      %19 = sbr.rel (%p17) target = $region17
    $region16: #{attention_pooling.1} parent=1 // pred_region
      %vm20 = vcmask 2048
      %21 = vst.msk [vmem:[#allocation2] sm:$0x7] %vm20, -1e+30
      %22 = vst.msk [vmem:[#allocation3] sm:$0x7] %vm20, 0.0
      %23 = vst [vmem:[#allocation4] sm:$0x7] 0.0
    $region17: #{attention_pooling.1} parent=1 // pred_fallthru
      _
    %v24 = vld [vmem:[%s0] sm:$0xf]
    %v25 = vld [vmem:[%s0 + $0x4] sm:$0xf]
    %v26 = vld [vmem:[%s0 + $0x8] sm:$0xf]
    %v27 = vld [vmem:[%s0 + $0xc] sm:$0xf]
    %v28 = vld [vmem:[%s0 + $0x10] sm:$0xf]
    %v29 = vld [vmem:[%s0 + $0x14] sm:$0xf]
    %v30 = vld [vmem:[%s0 + $0x18] sm:$0xf]
    %v31 = vld [vmem:[%s0 + $0x1c] sm:$0xf]
    %v32 = vld [vmem:[%s0 + $0x20] sm:$0xf]
    %v33 = vld [vmem:[%s0 + $0x24] sm:$0xf]
    %v34 = vld [vmem:[%s0 + $0x28] sm:$0xf]
    %v35 = vld [vmem:[%s0 + $0x2c] sm:$0xf]
    %v36 = vld [vmem:[%s0 + $0x30] sm:$0xf]
    %v37 = vld [vmem:[%s0 + $0x34] sm:$0xf]
    %v38 = vld [vmem:[%s0 + $0x38] sm:$0xf]
    %v39 = vld [vmem:[%s0 + $0x3c] sm:$0xf]
    %v40 = vld [vmem:[%s1] sm:$0x1]
    %v41 = vld [vmem:[%s2] sm:$0x1]
    %v58 = vunpack.c.l.b16 %v24
    %v59 = vunpack.c.l.b16 %v25
    %v60 = vunpack.c.l.b16 %v26
    %v61 = vunpack.c.l.b16 %v27
    %v62 = vunpack.c.l.b16 %v28
    %v63 = vunpack.c.l.b16 %v29
    %v64 = vunpack.c.l.b16 %v30
    %v65 = vunpack.c.l.b16 %v31
    %v66 = vunpack.c.l.b16 %v32
    %v67 = vunpack.c.l.b16 %v33
    %v68 = vunpack.c.l.b16 %v34
    %v69 = vunpack.c.l.b16 %v35
    %v70 = vunpack.c.l.b16 %v36
    %v71 = vunpack.c.l.b16 %v37
    %v72 = vunpack.c.l.b16 %v38
    %v73 = vunpack.c.l.b16 %v39
    %v74 = vpack.c.b16 %v59, %v58
    %v75 = vpack.c.b16 %v61, %v60
    %v76 = vpack.c.b16 %v63, %v62
    %v77 = vpack.c.b16 %v65, %v64
    %v78 = vpack.c.b16 %v67, %v66
    %v79 = vpack.c.b16 %v69, %v68
    %v80 = vpack.c.b16 %v71, %v70
    %v81 = vpack.c.b16 %v73, %v72
    %90 = vmatprep.subr.bf16.mxu0 0
    %91 = vmatpush1.bf16.xpose.msra.mxu0 %v74
    %92 = vmatprep.subr.bf16.mxu0 0
    %93 = vmatpush1.bf16.xpose.msra.mxu0 %v75
    %94 = vmatprep.subr.bf16.mxu0 0
    %95 = vmatpush1.bf16.xpose.msra.mxu0 %v76
    %96 = vmatprep.subr.bf16.mxu0 0
    %97 = vmatpush1.bf16.xpose.msra.mxu0 %v77
    %98 = vmatprep.subr.bf16.mxu0 0
    %99 = vmatpush1.bf16.xpose.msra.mxu0 %v78
    %100 = vmatprep.subr.bf16.mxu0 0
    %101 = vmatpush1.bf16.xpose.msra.mxu0 %v79
    %102 = vmatprep.subr.bf16.mxu0 0
    %103 = vmatpush1.bf16.xpose.msra.mxu0 %v80
    %104 = vmatprep.subr.bf16.mxu0 0
    %105 = vmatpush1.bf16.xpose.msra.mxu0 %v81
    %106 = vmatprep.subr.bf16.mxu0 0
    %107 = vmatpush1.bf16.xpose.msra.mxu0 0
    %108 = vmatprep.subr.bf16.mxu0 0
    %109 = vmatpush1.bf16.xpose.msra.mxu0 0
    %110 = vmatprep.subr.bf16.mxu0 0
    %111 = vmatpush1.bf16.xpose.msra.mxu0 0
    %112 = vmatprep.subr.bf16.mxu0 0
    %113 = vmatpush1.bf16.xpose.msra.mxu0 0
    %114 = vmatprep.subr.bf16.mxu0 0
    %115 = vmatpush1.bf16.xpose.msra.mxu0 0
    %116 = vmatprep.subr.bf16.mxu0 0
    %117 = vmatpush1.bf16.xpose.msra.mxu0 0
    %118 = vmatprep.subr.bf16.mxu0 0
    %119 = vmatpush1.bf16.xpose.msra.mxu0 0
    %120 = vmatprep.subr.bf16.mxu0 0
    %121 = vmatpush1.bf16.xpose.msra.mxu0 0
    %122 = vmatprep.mubr.bf16.mxu0 0
    %123 = vmatmul.mubr.bf16.gmra.mrb[0].mxu0 %v40
    %v124 = vpop.f32.mrb[0].mxu0
    %v125 = vadd.f32 0.0, %v124
    %v126 = vpop.f32.mrb[0].mxu0
    %v127 = vpop.f32.mrb[0].mxu0
    %v128 = vpop.f32.mrb[0].mxu0
    %129 = vdwg.mxu0
    %vm130 = vcmp.ge.f32.partialorder %v125, 0.0
    %v131 = vmul.f32 %v125, 0.2
    %v132 = vsel %vm130, %v125, %v131
    %s133 = smul.u32 0, 3
    %v134 = vlaneseq
    %v135 = vshrl.u32 %v134, 7
    %v136 = vstv %s133
    %v137 = vadd.s32 %v136, %v135
    %v138 = vlaneseq
    %v139 = vshrl.u32 %v138, 7
    %v140 = vsub.s32 0, %v139
    %v141 = vrot.slane %v41, %v140
    %vm142 = vcmp.eq.s32.totalorder %v141, %v137
    %v143 = vlaneseq
    %v144 = vshrl.u32 %v143, 7
    %v145 = vsub.s32 0, %v144
    %v146 = vrot.slane %v132, %v145
    %v147 = vsel %vm142, %v146, -1e+30
    %vm148 = vcmask 1042432
    %v149 = vsel %vm148, %v147, -inf
    %150 = vmax.xlane.f32.xlu0 %v149
    %v151 = vpop.xlane.xlu0 %150
    %v152 = vld [vmem:[#allocation2] sm:$0x7]
    %v153 = vmax.f32 %v152, %v151
    %v154 = vsub.f32 %v152, %v153
    %v155 = vmul.f32 %v154, 1.442695
    %v156 = vpow.pop %v155
    %158 = vset.pattern.permute.xlu0 0
    %159 = vperm.xlu0 %158, %v153
    %v160 = vpop.permute.xlu0 %159
    %v162 = vsub.f32 %v146, %v160
    %v163 = vmul.f32 %v162, 1.442695
    %v164 = vpow.pop %v163
    %v165 = vsel %vm142, %v164, 0.0
    %v166 = vld [vmem:[#allocation3] sm:$0x7]
    %v167 = vmul.f32 %v156, %v166
    %v168 = vsel %vm148, %v165, 0.0
    %169 = vadd.xlane.f32.xlu0 %v168
    %v170 = vpop.xlane.xlu0 %169
    %v171 = vadd.f32 %v167, %v170
    %vm172 = vcmask 2048
    %173 = vst.msk [vmem:[#allocation3] sm:$0x7] %vm172, %v171
    %v174 = vld [vmem:[#allocation4] sm:$0x7]
    %176 = vset.pattern.permute.xlu0 0
    %177 = vperm.xlu0 %176, %v156
    %v178 = vpop.permute.xlu0 %177
    %v180 = vmul.f32 %v178, %v174
    %v181 = vpack.c.bf16 %v165, %v165
    %182 = vmatprep.subr.bf16.mxu0 0
    %183 = vmatpush1.bf16.msra.mxu0 %v74
    %184 = vmatprep.subr.bf16.mxu0 0
    %185 = vmatpush1.bf16.msra.mxu0 %v75
    %186 = vmatprep.subr.bf16.mxu0 0
    %187 = vmatpush1.bf16.msra.mxu0 %v76
    %188 = vmatprep.subr.bf16.mxu0 0
    %189 = vmatpush1.bf16.msra.mxu0 %v77
    %190 = vmatprep.subr.bf16.mxu0 0
    %191 = vmatpush1.bf16.msra.mxu0 %v78
    %192 = vmatprep.subr.bf16.mxu0 0
    %193 = vmatpush1.bf16.msra.mxu0 %v79
    %194 = vmatprep.subr.bf16.mxu0 0
    %195 = vmatpush1.bf16.msra.mxu0 %v80
    %196 = vmatprep.subr.bf16.mxu0 0
    %197 = vmatpush1.bf16.msra.mxu0 %v81
    %198 = vmatprep.subr.bf16.mxu0 0
    %199 = vmatpush1.bf16.msra.mxu0 0
    %200 = vmatprep.subr.bf16.mxu0 0
    %201 = vmatpush1.bf16.msra.mxu0 0
    %202 = vmatprep.subr.bf16.mxu0 0
    %203 = vmatpush1.bf16.msra.mxu0 0
    %204 = vmatprep.subr.bf16.mxu0 0
    %205 = vmatpush1.bf16.msra.mxu0 0
    %206 = vmatprep.subr.bf16.mxu0 0
    %207 = vmatpush1.bf16.msra.mxu0 0
    %208 = vmatprep.subr.bf16.mxu0 0
    %209 = vmatpush1.bf16.msra.mxu0 0
    %210 = vmatprep.subr.bf16.mxu0 0
    %211 = vmatpush1.bf16.msra.mxu0 0
    %212 = vmatprep.subr.bf16.mxu0 0
    %213 = vmatpush1.bf16.msra.mxu0 0
    %214 = vmatprep.mubr.bf16.mxu0 0
    %215 = vmatmul.mubr.bf16.gmra.mrb[0].mxu0 %v181
    %v216 = vpop.f32.mrb[0].mxu0
    %v217 = vadd.f32 0.0, %v216
    %v218 = vpop.f32.mrb[0].mxu0
    %v219 = vpop.f32.mrb[0].mxu0
    %v220 = vpop.f32.mrb[0].mxu0
    %221 = vdwg.mxu0
    %v222 = vadd.f32 %v180, %v217
    %223 = vst [vmem:[#allocation4] sm:$0x7] %v222
    %224 = vst.msk [vmem:[#allocation2] sm:$0x7] %vm172, %v153
    // Predicated region
    $region18: #{attention_pooling.1} parent=1 // pred_check
      %p225 = pneg %p16
    $region19: #{attention_pooling.1} parent=1 // pred_check_branch
      %227 = sbr.rel (%p225) target = $region21
    $region20: #{attention_pooling.1} parent=1 // pred_region
      %v228 = vld [vmem:[#allocation3] sm:$0x7]
      %vm229 = vcmp.gt.f32.partialorder %v228, 0.0
      %v230 = vmax.f32 %v228, 1e-30
      %v231 = vrcp.pop %v230
      %v232 = vsel %vm229, %v231, 0.0
      %v233 = vld [vmem:[#allocation4] sm:$0x7]
      %235 = vset.pattern.permute.xlu0 0
      %236 = vperm.xlu0 %235, %v232
      %v237 = vpop.permute.xlu0 %236
      %v239 = vmul.f32 %v233, %v237
      %240 = vst [vmem:[#allocation5] sm:$0x7] %v239
    $region21: #{attention_pooling.1} parent=1 // pred_fallthru
      _
    // Predicated region
    $region22: #{attention_pooling.1} parent=1 // pred_check
      _
    $region23: #{attention_pooling.1} parent=1 // pred_check_branch
      %242 = sbr.rel (0) target = $region25
    $region24: #{attention_pooling.1} parent=1 // pred_region
      %s244 = ssub.s32 64, 64
      %245 = vsyncadd [#allocation6], %s244
      %s247 = sshll.u32 [#allocation5], 4
      %s248 = int_to_ptr.vmem [resolvable:$true] %s247
      %250 = dma.vmem_to_hbm [thread:$0]  %s248, 64, %s3, [#allocation6]
    $region25: #{attention_pooling.1} parent=1 // pred_fallthru
      _
    // Predicated region
    $region26: #{attention_pooling.1} parent=1 // pred_check
      _
    $region27: #{attention_pooling.1} parent=1 // pred_check_branch
      %252 = sbr.rel (0) target = $region29
    $region28: #{attention_pooling.1} parent=1 // pred_region
      %253 = dma.done [#allocation6], 64
    $region29: #{attention_pooling.1} parent=1 // pred_fallthru
      _
    %254 = vsyncpa [#allocation6], 1

</llo_original>
